<compile_context>
chip_gen: v7x
topology: tpu7x:2x2x1
jax: 0.10.0
libtpu: 0.0.40
codegen_flags: <defaults>
</compile_context>

<pallas_src>
import jax
import jax.numpy as jnp
from jax.experimental import pallas as pl
from jax.experimental.pallas import tpu as pltpu


def _round_up(x, m):
    return ((x + m - 1) // m) * m


def _actnorm_kernel(x_ref, shift_ref, scale_ref, o_ref):
    # x_ref: (tile_r, tile_c); shift_ref/scale_ref: (tile_r, 1) float32.
    x = x_ref[...].astype(jnp.float32)
    o_ref[...] = ((x + shift_ref[...]) * scale_ref[...]).astype(o_ref.dtype)


def forward_actnorm(x, bias, logs, bias_offset=None, logs_offset=None,
                    offset_mask=None):
    """ForwardActNorm.forward.

    x:    (N, C, H, W)
    bias: (1, C, 1, 1)
    logs: (1, C, 1, 1)
    Optional per-channel offsets (shape broadcastable to (1, C, 1, 1)) and
    offset_mask are folded into effective shift/scale in f32 JAX glue before
    the kernel (only C values, so this is not the "pre-scale the big tensor in
    the wrapper" anti-pattern).
    """
    N, C, H, W = x.shape
    HW = H * W
    R = N * C

    # --- fold parameters (f32, per-channel) -------------------------------
    b = bias.reshape(C).astype(jnp.float32)
    l = logs.reshape(C).astype(jnp.float32)
    if offset_mask is not None:
        # TODO(synk): only per-channel offset_mask supported; spatially-varying
        # masks would need a full-shape broadcast inside the kernel.
        m = offset_mask.reshape(C).astype(jnp.float32)
        if logs_offset is not None:
            logs_offset = logs_offset.reshape(C).astype(jnp.float32) * m
        if bias_offset is not None:
            bias_offset = bias_offset.reshape(C).astype(jnp.float32) * m
    if bias_offset is not None:
        b = b + bias_offset.reshape(C).astype(jnp.float32)
    if logs_offset is not None:
        l = l + logs_offset.reshape(C).astype(jnp.float32)
    scale = jnp.exp(l)                      # exp hoisted out of the kernel.

    # --- tiling ------------------------------------------------------------
    LANE, SUB = 128, 8
    tile_c = min(_round_up(HW, LANE), 1024)          # lane-dense column tile
    tile_r = min(_round_up(R, SUB), 512)             # sublane-aligned row tile
    HW_pad = _round_up(HW, tile_c)
    R_pad = _round_up(R, tile_r)
    # Per-tile f32 footprint: tile_r*tile_c*4 <= 2 MiB -> ~8 MiB double-buffered
    # (in + out), safe within v7x's 64 MiB physical VMEM.

    # --- build 2D operands (pad if needed) ---------------------------------
    x2d = x.reshape(R, HW)
    if R_pad != R or HW_pad != HW:
        x2d = jnp.pad(x2d, ((0, R_pad - R), (0, HW_pad - HW)))

    shift_row = jnp.tile(b, N)              # row r -> channel r % C
    scale_row = jnp.tile(scale, N)
    if R_pad != R:
        shift_row = jnp.pad(shift_row, (0, R_pad - R))
        scale_row = jnp.pad(scale_row, (0, R_pad - R))
    shift2d = shift_row.reshape(R_pad, 1)
    scale2d = scale_row.reshape(R_pad, 1)

    grid = (R_pad // tile_r, HW_pad // tile_c)

    out2d = pl.pallas_call(
        _actnorm_kernel,
        out_shape=jax.ShapeDtypeStruct((R_pad, HW_pad), x.dtype),
        grid=grid,
        in_specs=[
            pl.BlockSpec((tile_r, tile_c), lambda i, j: (i, j)),
            # shift/scale: block index ignores j -> stays VMEM-resident across
            # the column axis (no re-DMA per column tile). Last dim (1) equals
            # the full array dim, so the (8,128) rule is satisfied.
            pl.BlockSpec((tile_r, 1), lambda i, j: (i, 0)),
            pl.BlockSpec((tile_r, 1), lambda i, j: (i, 0)),
        ],
        out_specs=pl.BlockSpec((tile_r, tile_c), lambda i, j: (i, j)),
        compiler_params=pltpu.CompilerParams(
            # All grid axes are independent (no accumulator): fully parallel.
            dimension_semantics=("parallel", "parallel"),
            # Headroom below v7x's 64 MiB physical; generous on v5e/v6e.
            vmem_limit_bytes=48 * 1024 * 1024,
        ),
    )(x2d, shift2d, scale2d)

    if R_pad != R or HW_pad != HW:
        out2d = out2d[:R, :HW]
    return out2d.reshape(N, C, H, W)


if __name__ == "__main__":
    key = jax.random.PRNGKey(0)
    kx, kb, kl, kbo, klo = jax.random.split(key, 5)

    N, C, H, W = 2, 4, 16, 16
    x = jax.random.normal(kx, (N, C, H, W), dtype=jnp.float32)
    # Deterministic, non-zero parameters (module would be "inited" already).
    bias = 0.1 * jax.random.normal(kb, (1, C, 1, 1), dtype=jnp.float32)
    logs = 0.1 * jax.random.normal(kl, (1, C, 1, 1), dtype=jnp.float32)

    # Plain forward.
    out = forward_actnorm(x, bias, logs)
    out = jax.block_until_ready(out)
    ref = (x + bias) * jnp.exp(logs)
    assert out.shape == (N, C, H, W)
    assert jnp.allclose(out, ref, atol=1e-6, rtol=1e-6)

    # With per-channel offsets + mask (matches PyTorch: offsets scaled by mask,
    # then folded into bias/logs).
    bias_off = 0.05 * jax.random.normal(kbo, (1, C, 1, 1), dtype=jnp.float32)
    logs_off = 0.05 * jax.random.normal(klo, (1, C, 1, 1), dtype=jnp.float32)
    mask = jnp.ones((1, C, 1, 1), dtype=jnp.float32)
    out2 = forward_actnorm(x, bias, logs, bias_offset=bias_off,
                           logs_offset=logs_off, offset_mask=mask)
    out2 = jax.block_until_ready(out2)
    ref2 = (x + bias + bias_off * mask) * jnp.exp(logs + logs_off * mask)
    assert jnp.allclose(out2, ref2, atol=1e-6, rtol=1e-6)

    print("KERNEL_OK")
</pallas_src>

<mosaic_0001>
module attributes {stable_mosaic.version = 11 : i64} {
  func.func @_actnorm_kernel(%arg0: i32, %arg1: i32, %arg2: memref<8x256xf32, #tpu.memory_space<vmem>>, %arg3: memref<8x1xf32, #tpu.memory_space<vmem>>, %arg4: memref<8x1xf32, #tpu.memory_space<vmem>>, %arg5: memref<8x256xf32, #tpu.memory_space<vmem>>) attributes {dimension_semantics = [#tpu.dimension_semantics<parallel>, #tpu.dimension_semantics<parallel>], iteration_bounds = array<i64: 1, 1>, scalar_prefetch = 0 : i64, scratch_operands = 0 : i64, tpu.core_type = #tpu.core_type<tc>, window_params = [{transform_indices = @transform_0, window_bounds = array<i64: 8, 256>}, {transform_indices = @transform_1, window_bounds = array<i64: 8, 1>}, {transform_indices = @transform_2, window_bounds = array<i64: 8, 1>}, {transform_indices = @transform_3, window_bounds = array<i64: 8, 256>}]} {
    %c0 = arith.constant 0 : index
    %c0_0 = arith.constant 0 : index
    %0 = vector.load %arg2[%c0, %c0_0] : memref<8x256xf32, #tpu.memory_space<vmem>>, vector<8x256xf32>
    %c0_1 = arith.constant 0 : index
    %c0_2 = arith.constant 0 : index
    %1 = vector.load %arg3[%c0_1, %c0_2] : memref<8x1xf32, #tpu.memory_space<vmem>>, vector<8x1xf32>
    %2 = vector.broadcast %1 : vector<8x1xf32> to vector<8x256xf32>
    %3 = arith.addf %0, %2 : vector<8x256xf32>
    %c0_3 = arith.constant 0 : index
    %c0_4 = arith.constant 0 : index
    %4 = vector.load %arg4[%c0_3, %c0_4] : memref<8x1xf32, #tpu.memory_space<vmem>>, vector<8x1xf32>
    %5 = vector.broadcast %4 : vector<8x1xf32> to vector<8x256xf32>
    %6 = arith.mulf %3, %5 : vector<8x256xf32>
    %c0_5 = arith.constant 0 : index
    %c0_6 = arith.constant 0 : index
    %7 = vector.load %arg5[%c0_5, %c0_6] : memref<8x256xf32, #tpu.memory_space<vmem>>, vector<8x256xf32>
    tpu.vector_store %arg5[%c0_5, %c0_6], %6 {strides = array<i32>} : memref<8x256xf32, #tpu.memory_space<vmem>>, vector<8x256xf32>,
    return
  }
  func.func @transform_0(%arg0: i32, %arg1: i32) -> (i32, i32) {
    %c0_i32 = arith.constant 0 : i32
    return %arg0, %arg1 : i32, i32
  }
  func.func @transform_1(%arg0: i32, %arg1: i32) -> (i32, i32) {
    %c0_i32 = arith.constant 0 : i32
    %c0_i32_0 = arith.constant 0 : i32
    return %arg0, %c0_i32 : i32, i32
  }
  func.func @transform_2(%arg0: i32, %arg1: i32) -> (i32, i32) {
    %c0_i32 = arith.constant 0 : i32
    %c0_i32_0 = arith.constant 0 : i32
    return %arg0, %c0_i32 : i32, i32
  }
  func.func @transform_3(%arg0: i32, %arg1: i32) -> (i32, i32) {
    %c0_i32 = arith.constant 0 : i32
    return %arg0, %arg1 : i32, i32
  }
}

</mosaic_0001>

<llo_original>
// kernel: tpu_custom_call.1
$region0: #{tpu_custom_call.1}
  #allocation0 [shape = 'u32[]', space=smem, size = 0x4, offset = 0x4, fixed_abs, tag = 'smem constant byte address 0x4 - core index']
  #allocation1 [shape = 'u32[144,128]{1,0:T(1,128)}', space=vmem, size = 0x12000, scoped, tag = 'internal scratch']
  %s0 = inlined_call_operand.vmem [shape: f32[8,256], index: 0, kind: input, shape index: {}]
  %s1 = inlined_call_operand.vmem [shape: f32[8,1], index: 1, kind: input, shape index: {}]
  %s2 = inlined_call_operand.vmem [shape: f32[8,1], index: 2, kind: input, shape index: {}]
  %s3 = inlined_call_operand.hbm [shape: f32[8,256], index: 3, kind: output, shape index: {}]
  %s4 = sld [smem:[#allocation0]]
  $region22: #{tpu_custom_call.1} parent=0
    _
  %s6 = ssub.s32 1, %s4
  %s7 = scalar_select 0, %s6, %s4
  $region1: #{tpu_custom_call.1} parent=0
    #allocation2 [shape = 'u8[8192]{0}', space=vmem, size = 0x2000, scoped, tag = 'output window, operand 0, single buffered']
    #allocation3 [shape = 's32[1]{0}', space=sflag, size = 0x4, scoped, tag = 'scoped memory for tpu_custom_call.1']
    %8 = vsyncpa [#allocation3], 0
    // Predicated region
    $region2: #{tpu_custom_call.1} parent=1 // pred_check
      _
    $region3: #{tpu_custom_call.1} parent=1 // pred_check_branch
      %10 = sbr.rel (0) target = $region5
    $region4: #{tpu_custom_call.1} parent=1 // pred_region
      _
    $region5: #{tpu_custom_call.1} parent=1 // pred_fallthru
      _
    // Predicated region
    $region6: #{tpu_custom_call.1} parent=1 // pred_check
      _
    $region7: #{tpu_custom_call.1} parent=1 // pred_check_branch
      %12 = sbr.rel (0) target = $region9
    $region8: #{tpu_custom_call.1} parent=1 // pred_region
      _
    $region9: #{tpu_custom_call.1} parent=1 // pred_fallthru
      _
    // Predicated region
    $region10: #{tpu_custom_call.1} parent=1 // pred_check
      _
    $region11: #{tpu_custom_call.1} parent=1 // pred_check_branch
      %14 = sbr.rel (0) target = $region13
    $region12: #{tpu_custom_call.1} parent=1 // pred_region
      _
    $region13: #{tpu_custom_call.1} parent=1 // pred_fallthru
      _
    %v15 = vld [vmem:[%s0] sm:$0xff]
    %v16 = vld [vmem:[%s0 + $0x8] sm:$0xff]
    %v17 = vld [vmem:[%s1] sm:$0xff]
    %19 = vset.pattern.permute.xlu0 0
    %20 = vperm.xlu0 %19, %v17
    %v21 = vpop.permute.xlu0 %20
    %v23 = vadd.f32 %v15, %v21
    %v24 = vadd.f32 %v16, %v21
    %v25 = vld [vmem:[%s2] sm:$0xff]
    %27 = vset.pattern.permute.xlu0 0
    %28 = vperm.xlu0 %27, %v25
    %v29 = vpop.permute.xlu0 %28
    %v31 = vmul.f32 %v23, %v29
    %v32 = vmul.f32 %v24, %v29
    %33 = vst [vmem:[#allocation2] sm:$0xff] %v31
    %34 = vst [vmem:[#allocation2 + $0x8] sm:$0xff] %v32
    // Predicated region
    $region14: #{tpu_custom_call.1} parent=1 // pred_check
      _
    $region15: #{tpu_custom_call.1} parent=1 // pred_check_branch
      %36 = sbr.rel (0) target = $region17
    $region16: #{tpu_custom_call.1} parent=1 // pred_region
      %s38 = ssub.s32 256, 256
      %39 = vsyncadd [#allocation3], %s38
      %s41 = sshll.u32 [#allocation2], 4
      %s42 = int_to_ptr.vmem [resolvable:$true] %s41
      %44 = dma.vmem_to_hbm [thread:$0]  %s42, 256, %s3, [#allocation3]
    $region17: #{tpu_custom_call.1} parent=1 // pred_fallthru
      _
    // Predicated region
    $region18: #{tpu_custom_call.1} parent=1 // pred_check
      _
    $region19: #{tpu_custom_call.1} parent=1 // pred_check_branch
      %46 = sbr.rel (0) target = $region21
    $region20: #{tpu_custom_call.1} parent=1 // pred_region
      %47 = dma.done [#allocation3], 256
    $region21: #{tpu_custom_call.1} parent=1 // pred_fallthru
      _
    %48 = vsyncpa [#allocation3], 1

</llo_original>
